<compile_context>
chip_gen: v7x
topology: tpu7x:2x2x1
jax: 0.10.0
libtpu: 0.0.40
codegen_flags: <defaults>
</compile_context>

<pallas_src>
from functools import partial

import numpy as np
import jax
import jax.numpy as jnp
from jax import lax
from jax.experimental import pallas as pl
from jax.experimental.pallas import tpu as pltpu

BLOCKSIZE = 16   # args.blocksize in the reference code
NF = 32          # feature channels


# --------------------------------------------------------------------------
# Small standalone kernels (CS measurement model)
# --------------------------------------------------------------------------

def matmul_kernel(a_ref, b_ref, o_ref):
    o_ref[...] = jnp.dot(a_ref[...], b_ref[...], preferred_element_type=jnp.float32)


def pallas_matmul(a, b):
    # Whole-array VMEM blocks; fine at (64,256)x(256,256).  Add BlockSpecs and a
    # grid before scaling the CS problem size.
    return pl.pallas_call(
        matmul_kernel,
        out_shape=jax.ShapeDtypeStruct((a.shape[0], b.shape[1]), jnp.float32),
    )(a, b)


def grad_step_kernel(x_ref, ptp_ref, ptb_ref, lam_ref, o_ref):
    # x <- x - lam * x @ PhiTPhi + lam * PhiTb
    lam = lam_ref[0]                      # scalar from SMEM
    x = x_ref[...]
    o_ref[...] = (x
                  - lam * jnp.dot(x, ptp_ref[...], preferred_element_type=jnp.float32)
                  + lam * ptb_ref[...])


def pallas_grad_step(x, PhiTPhi, PhiTb, lam):
    vmem = pl.BlockSpec(memory_space=pltpu.MemorySpace.VMEM)
    smem = pl.BlockSpec(memory_space=pltpu.MemorySpace.SMEM)
    return pl.pallas_call(
        grad_step_kernel,
        out_shape=jax.ShapeDtypeStruct(x.shape, jnp.float32),
        in_specs=[vmem, vmem, vmem, smem],
        out_specs=vmem,
    )(x, PhiTPhi, PhiTb, jnp.reshape(lam, (1,)).astype(jnp.float32))


# --------------------------------------------------------------------------
# pltpu.roll direction probe (one tiny kernel, run once at startup)
# --------------------------------------------------------------------------

def _detect_roll_semantics():
    n = 256
    base = np.tile(np.arange(n, dtype=np.float32), (8, 1))

    def probe_kernel(x_ref, o_ref):
        o_ref[...] = pltpu.roll(x_ref[...], 1, axis=1)

    y = pl.pallas_call(
        probe_kernel,
        out_shape=jax.ShapeDtypeStruct((8, n), jnp.float32),
    )(jnp.asarray(base))
    y = np.asarray(jax.block_until_ready(y))
    if np.array_equal(y, np.roll(base, 1, axis=1)):
        return True          # pltpu.roll(x, s)[p] == x[p - s]
    if np.array_equal(y, np.roll(base, -1, axis=1)):
        return False         # pltpu.roll(x, s)[p] == x[p + s]
    raise RuntimeError("unexpected pltpu.roll semantics")


# --------------------------------------------------------------------------
# Fused per-layer kernel: head conv + 3x CPMB + tail conv + residual
# --------------------------------------------------------------------------

def fused_layer_kernel(x_ref, alpha_ref, head_w_ref, head_b_ref,
                       w1_ref, b1_ref, w2_ref, b2_ref,
                       tail_w_ref, tail_b_ref,
                       o_ref, mask_ref,
                       *, H, W, nf, roll_like_np):
    HW = H * W

    def lroll(x, s):
        # out[..., p] = x[..., (p + s) % HW]  (lane rotation; XLU slot)
        shift = (-s) % HW if roll_like_np else s % HW
        return pltpu.roll(x, shift, axis=1)

    # ---- border masks, hoisted once; full-size copies live in VMEM scratch --
    lane = lax.broadcasted_iota(jnp.int32, (1, HW), 1)
    col = lane % W
    row = lane // W
    small_masks = ((row > 0).astype(jnp.float32),        # 0: dh = -1 valid
                   (row < H - 1).astype(jnp.float32),     # 1: dh = +1 valid
                   (col > 0).astype(jnp.float32),         # 2: dw = -1 valid
                   (col < W - 1).astype(jnp.float32))     # 3: dw = +1 valid
    for i in range(4):
        mask_ref[i] = jnp.broadcast_to(small_masks[i], (nf, HW))

    feat_mask = lambda i: mask_ref[i]      # re-read per tap: vld slots have slack
    img_mask = lambda i: small_masks[i]    # head conv works on the (1, HW) image

    def conv3x3(src, mac, mask_at):
        # 3x3 "same" conv over the flattened row-major (.., HW) image layout.
        # Taps = lane-rolled copies of src; image borders zeroed with 0/1 masks.
        out = None
        for dh in (-1, 0, 1):
            v = src if dh == 0 else lroll(src, dh * W) * mask_at(0 if dh < 0 else 1)
            for dw in (-1, 0, 1):
                t = v if dw == 0 else lroll(v, dw) * mask_at(2 if dw < 0 else 3)
                p = mac((dh + 1) * 3 + (dw + 1), t)
                out = p if out is None else out + p
        return out

    def mxu_conv(src, w_at, bias):
        # 9 accumulating (Cout, Cin)bf16 @ (Cin, HW)bf16 matmuls, f32 accumulation.
        mac = lambda k, t: jnp.dot(w_at(k), t.astype(jnp.bfloat16),
                                   preferred_element_type=jnp.float32)
        return conv3x3(src, mac, feat_mask) + bias

    # ---- head conv 1 -> nf (Cin == 1: VPU outer products, f32) --------------
    img = x_ref[...]                                            # (1, HW) f32
    head_mac = lambda k, t: head_w_ref[:, k:k + 1] * t          # (nf,1)*(1,HW)
    feat = conv3x3(img, head_mac, img_mask) + head_b_ref[...]   # (nf, HW) f32

    # ---- 3 x CPMB (activations stay f32; only MXU operands are bf16) --------
    alpha = alpha_ref[...]                                      # (nf, 1)
    for j in range(3):
        h = jnp.maximum(
            mxu_conv(feat, lambda k, j=j: w1_ref[j * 9 + k], b1_ref[j]), 0.0)
        feat = feat + mxu_conv(h, lambda k, j=j: w2_ref[j * 9 + k], b2_ref[j]) * alpha

    # ---- tail conv nf -> 1 (Cout padded to 8 for the MXU) + residual --------
    out = mxu_conv(feat, lambda k: tail_w_ref[k], tail_b_ref[...])   # (8, HW)
    o_ref[...] = x_ref[...] + out[0:1, :]                            # re-read x (no long live range)


def pallas_fused_layer(x_row, alpha_col, lw, H, W, nf=NF, roll_like_np=True):
    HW = H * W
    kernel = partial(fused_layer_kernel, H=H, W=W, nf=nf, roll_like_np=roll_like_np)
    flops = 2 * HW * 9 * nf * (6 * nf + 9)      # 6 nf->nf convs + head + padded tail
    bytes_accessed = 3 * HW * 4
    for v in lw.values():
        bytes_accessed += int(np.prod(v.shape)) * v.dtype.itemsize
    # TODO(synk): add a batch / H-row-tile grid with dimension_semantics=("parallel",)
    # so the second TensorCore on v7x is used; a single 32x32 image here.
    return pl.pallas_call(
        kernel,
        out_shape=jax.ShapeDtypeStruct((1, HW), jnp.float32),
        scratch_shapes=[pltpu.VMEM((4, nf, HW), jnp.float32)],   # 0/1 border masks
        cost_estimate=pl.CostEstimate(flops=int(flops), transcendentals=0,
                                      bytes_accessed=int(bytes_accessed)),
    )(x_row, alpha_col,
      lw['head_w'], lw['head_b'],
      lw['w1s'], lw['b1s'], lw['w2s'], lw['b2s'],
      lw['tail_w'], lw['tail_b'])


def prep_layer_weights(lp, nf=NF):
    # Stored conv weights are (9, Cin, Cout); the kernel wants per-tap (Cout, Cin)
    # bf16 MXU operands and (Cout, 1) f32 bias columns (channels on sublanes).
    def w_T(w):
        return jnp.transpose(w, (0, 2, 1)).astype(jnp.bfloat16)

    def b_col(b):
        return jnp.reshape(b, (-1, 1)).astype(jnp.float32)

    tail_w = jnp.pad(w_T(lp['tail_w']), ((0, 0), (0, 7), (0, 0)))        # (9, 8, nf)
    tail_b = jnp.pad(lp['tail_b'].reshape(1, 1), ((0, 7), (0, 0))).astype(jnp.float32)
    return {
        'head_w': jnp.transpose(lp['head_w'].reshape(9, nf)).astype(jnp.float32),  # (nf, 9)
        'head_b': b_col(lp['head_b']),                                             # (nf, 1)
        'w1s': jnp.concatenate([w_T(cp['w1']) for cp in lp['cpmb']], axis=0),      # (27, nf, nf)
        'b1s': jnp.stack([b_col(cp['b1']) for cp in lp['cpmb']]),                  # (3, nf, 1)
        'w2s': jnp.concatenate([w_T(cp['w2']) for cp in lp['cpmb']], axis=0),
        'b2s': jnp.stack([b_col(cp['b2']) for cp in lp['cpmb']]),
        'tail_w': tail_w,                                                          # (9, 8, nf) bf16
        'tail_b': tail_b,                                                          # (8, 1) f32
    }


# --------------------------------------------------------------------------
# COAST forward (layer_no stacked BasicBlocks)
# --------------------------------------------------------------------------

def coast_forward(Phix, cond, Phi, params, *, R, C, bs, layer_no, roll_like_np=True):
    # Phix: (B, M), cond: (1, 2), Phi: (M, N),  N = bs*bs, B = R*C
    PhiTPhi = pallas_matmul(Phi.T, Phi)          # (N, N)
    PhiTb = pallas_matmul(Phix, Phi)             # (B, N)
    x = PhiTb

    # shared res_scale Linear(1, nf) -> per-channel alpha (tiny; XLA glue)
    cond0 = cond[:, 0:1]
    alpha = jnp.dot(cond0, params['res_w']) + params['res_b'][None, :]   # (1, nf)
    alpha_col = jnp.reshape(alpha, (-1, 1))                              # (nf, 1)

    H, W = R * bs, C * bs
    for i in range(layer_no):
        lp = params['layers'][i]
        lw = prep_layer_weights(lp)
        # gradient descent step on the measurement model
        x = pallas_grad_step(x, PhiTPhi, PhiTb, lp['lam'])
        # blocks -> full image, flattened (1, H*W)   (4 KiB XLA relayout glue)
        # TODO(synk): fold the grad step + this block<->image permute into the
        # fused kernel once an in-kernel (R,C,bs,bs)<->(H,W) relayout is cheap.
        x_img = x.reshape(R, C, bs, bs).transpose(0, 2, 1, 3).reshape(1, H * W)
        # one fused kernel per layer: head conv + 3 CPMBs + tail + residual
        x_pred = pallas_fused_layer(x_img, alpha_col, lw, H, W,
                                    roll_like_np=roll_like_np)
        # full image -> blocks   (4 KiB XLA relayout glue)
        x = x_pred.reshape(R, bs, C, bs).transpose(0, 2, 1, 3).reshape(R * C, bs * bs)
    return x


# --------------------------------------------------------------------------
# Pure-JAX reference (f32, HIGHEST precision)
# --------------------------------------------------------------------------

def _ref_im2col(feat_flat, H, W):
    cin = feat_flat.shape[1]
    img = feat_flat.reshape(H, W, cin)
    pad = jnp.pad(img, ((1, 1), (1, 1), (0, 0)))
    return jnp.stack([pad[dh:dh + H, dw:dw + W, :].reshape(H * W, cin)
                      for dh in range(3) for dw in range(3)], axis=0)


def _ref_conv3x3(feat_flat, H, W, w9, b):
    hi = lax.Precision.HIGHEST
    patches = _ref_im2col(feat_flat, H, W)
    acc = jnp.zeros((feat_flat.shape[0], w9.shape[-1]), jnp.float32)
    for k in range(9):
        acc = acc + jnp.dot(patches[k], w9[k], precision=hi)
    return acc + b[None, :]


def ref_forward(Phix, cond, Phi, params, R, C, bs, layer_no):
    hi = lax.Precision.HIGHEST
    PhiTPhi = jnp.dot(Phi.T, Phi, precision=hi)
    PhiTb = jnp.dot(Phix, Phi, precision=hi)
    x = PhiTb
    cond0 = cond[:, 0:1]
    alpha = jnp.dot(cond0, params['res_w'], precision=hi) + params['res_b'][None, :]
    H, W = R * bs, C * bs
    for i in range(layer_no):
        lp = params['layers'][i]
        x = x - lp['lam'] * jnp.dot(x, PhiTPhi, precision=hi) + lp['lam'] * PhiTb
        x_input = x.reshape(R, C, bs, bs).transpose(0, 2, 1, 3).reshape(H * W, 1)
        feat = _ref_conv3x3(x_input, H, W, lp['head_w'], lp['head_b'])
        for j in range(3):
            cp = lp['cpmb'][j]
            h = jnp.maximum(_ref_conv3x3(feat, H, W, cp['w1'], cp['b1']), 0.0)
            feat = feat + _ref_conv3x3(h, H, W, cp['w2'], cp['b2']) * alpha
        x_pred = x_input + _ref_conv3x3(feat, H, W, lp['tail_w'], lp['tail_b'])
        x = x_pred.reshape(R, bs, C, bs).transpose(0, 2, 1, 3).reshape(R * C, bs * bs)
    return x


# --------------------------------------------------------------------------
# Parameter init
# --------------------------------------------------------------------------

def init_params(key, layer_no, nf=NF):
    ks = jax.random.split(key, 1 + layer_no)
    rk = jax.random.split(ks[0], 2)
    params = {
        # shared res_scale_linear: Linear(1, nf)  (weight stored transposed)
        'res_w': jax.random.normal(rk[0], (1, nf), jnp.float32) * 0.1,
        'res_b': jnp.full((nf,), 0.1, jnp.float32),
        'layers': [],
    }
    for i in range(layer_no):
        lk = jax.random.split(ks[1 + i], 9)
        layer = {
            'lam': jnp.array(0.5, jnp.float32),
            'head_w': jax.random.normal(lk[0], (9, 1, nf), jnp.float32) * 0.05,
            'head_b': jax.random.normal(lk[1], (nf,), jnp.float32) * 0.01,
            'tail_w': jax.random.normal(lk[2], (9, nf, 1), jnp.float32) * 0.05,
            'tail_b': jax.random.normal(lk[3], (1,), jnp.float32) * 0.01,
            'cpmb': [],
        }
        for j in range(3):
            ck = jax.random.split(lk[4 + j], 4)
            layer['cpmb'].append({
                'w1': jax.random.normal(ck[0], (9, nf, nf), jnp.float32) * 0.05,
                'b1': jax.random.normal(ck[1], (nf,), jnp.float32) * 0.01,
                'w2': jax.random.normal(ck[2], (9, nf, nf), jnp.float32) * 0.05,
                'b2': jax.random.normal(ck[3], (nf,), jnp.float32) * 0.01,
            })
        params['layers'].append(layer)
    return params


# --------------------------------------------------------------------------
# main
# --------------------------------------------------------------------------

if __name__ == "__main__":
    key = jax.random.PRNGKey(0)
    R, C, bs = 2, 2, BLOCKSIZE           # block_num_row, block_num_col, blocksize
    N = bs * bs                          # 256 pixels per block
    M = 64                               # CS measurements
    B = R * C                            # number of image blocks
    layer_no = 2                         # stacked BasicBlocks

    k1, k2, k3, k4 = jax.random.split(key, 4)
    Phi = jax.random.normal(k1, (M, N), jnp.float32) / jnp.sqrt(N)
    Phix = jax.random.normal(k2, (B, M), jnp.float32)    # x[0] in COAST.forward
    cond = jax.random.uniform(k3, (1, 2), jnp.float32)   # x[1] in COAST.forward
    params = init_params(k4, layer_no)

    ref = np.asarray(ref_forward(Phix, cond, Phi, params, R, C, bs, layer_no))

    # resolve pltpu.roll direction once before building/tracing the kernels
    roll_like_np = _detect_roll_semantics()

    fwd = jax.jit(partial(coast_forward, R=R, C=C, bs=bs, layer_no=layer_no,
                          roll_like_np=roll_like_np))
    out = jax.block_until_ready(fwd(Phix, cond, Phi, params))
    assert out.shape == (B, N)
    # bf16 MXU operands with f32 accumulation -> slightly looser tolerance
    # than a pure-f32 pipeline.
    np.testing.assert_allclose(np.asarray(out), ref, rtol=1e-2, atol=5e-3)

    print("KERNEL_OK")
</pallas_src>

<mosaic_0001>
module attributes {stable_mosaic.version = 11 : i64} {
  func.func @probe_kernel(%arg0: memref<8x256xf32, #tpu.memory_space<vmem>>, %arg1: memref<8x256xf32, #tpu.memory_space<vmem>>) attributes {dimension_semantics = [], scalar_prefetch = 0 : i64, scratch_operands = 0 : i64, tpu.core_type = #tpu.core_type<tc>} {
    %c0 = arith.constant 0 : index
    %c0_0 = arith.constant 0 : index
    %0 = vector.load %arg0[%c0, %c0_0] : memref<8x256xf32, #tpu.memory_space<vmem>>, vector<8x256xf32>
    %c1_i32 = arith.constant 1 : i32
    %1 = tpu.dynamic_rotate %0 by %c1_i32 dim 1 : vector<8x256xf32>, i32 -> vector<8x256xf32>
    %c0_1 = arith.constant 0 : index
    %c0_2 = arith.constant 0 : index
    %2 = vector.load %arg1[%c0_1, %c0_2] : memref<8x256xf32, #tpu.memory_space<vmem>>, vector<8x256xf32>
    tpu.vector_store %arg1[%c0_1, %c0_2], %1 {strides = array<i32>} : memref<8x256xf32, #tpu.memory_space<vmem>>, vector<8x256xf32>,
    return
  }
}

</mosaic_0001>

<llo_original>
// kernel: tpu_custom_call.1
$region0: #{tpu_custom_call.1}
  #allocation0 [shape = 'u32[]', space=smem, size = 0x4, offset = 0x4, fixed_abs, tag = 'smem constant byte address 0x4 - core index']
  #allocation1 [shape = 'u32[144,128]{1,0:T(1,128)}', space=vmem, size = 0x12000, scoped, tag = 'internal scratch']
  %s0 = inlined_call_operand.hbm [shape: f32[8,256], index: 0, kind: input, shape index: {}]
  %s1 = inlined_call_operand.hbm [shape: f32[8,256], index: 1, kind: output, shape index: {}]
  %s2 = sld [smem:[#allocation0]]
  $region18: #{tpu_custom_call.1} parent=0
    _
  %s4 = ssub.s32 1, %s2
  %s5 = scalar_select 0, %s4, %s2
  $region1: #{tpu_custom_call.1} parent=0
    #allocation2 [shape = 'u8[8192]{0}', space=vmem, size = 0x2000, scoped, tag = 'input window, operand 0, single buffered']
    #allocation3 [shape = 's32[1]{0}', space=sflag, size = 0x4, scoped, tag = 'scoped memory for tpu_custom_call.1']
    #allocation4 [shape = 's32[1]{0}', space=sflag, size = 0x4, scoped, tag = 'scoped memory for tpu_custom_call.1']
    #allocation5 [shape = 'u8[8192]{0}', space=vmem, size = 0x2000, scoped, tag = 'output window, operand 0, single buffered']
    %6 = vsyncpa [#allocation3], 0
    %7 = vsyncpa [#allocation4], 0
    // Predicated region
    $region2: #{tpu_custom_call.1} parent=1 // pred_check
      _
    $region3: #{tpu_custom_call.1} parent=1 // pred_check_branch
      %9 = sbr.rel (0) target = $region5
    $region4: #{tpu_custom_call.1} parent=1 // pred_region
      %s11 = ssub.s32 256, 256
      %12 = vsyncadd [#allocation3], %s11
      %s14 = sshll.u32 [#allocation2], 4
      %s15 = int_to_ptr.vmem [resolvable:$true] %s14
      %17 = dma.hbm_to_vmem [thread:$0]  %s0, 256, %s15, [#allocation3]
    $region5: #{tpu_custom_call.1} parent=1 // pred_fallthru
      _
    // Predicated region
    $region6: #{tpu_custom_call.1} parent=1 // pred_check
      _
    $region7: #{tpu_custom_call.1} parent=1 // pred_check_branch
      %19 = sbr.rel (0) target = $region9
    $region8: #{tpu_custom_call.1} parent=1 // pred_region
      %20 = dma.done [#allocation3], 256
    $region9: #{tpu_custom_call.1} parent=1 // pred_fallthru
      _
    %v21 = vld [vmem:[#allocation2] sm:$0xff]
    %v22 = vld [vmem:[#allocation2 + $0x8] sm:$0xff]
    %23 = vrot.lane.b32.xlu0 %v21, 1
    %v24 = vpop.permute.xlu0 %23
    %25 = vrot.lane.b32.xlu0 %v22, 1
    %v26 = vpop.permute.xlu0 %25
    %v27 = vlaneseq
    %v28 = vand.u32 %v27, 127
    %vm29 = vcmp.lt.s32.totalorder %v28, 1
    %v30 = vsel %vm29, %v24, %v26
    %v31 = vsel %vm29, %v26, %v24
    %32 = vst [vmem:[#allocation5] sm:$0xff] %v31
    %33 = vst [vmem:[#allocation5 + $0x8] sm:$0xff] %v30
    // Predicated region
    $region10: #{tpu_custom_call.1} parent=1 // pred_check
      _
    $region11: #{tpu_custom_call.1} parent=1 // pred_check_branch
      %35 = sbr.rel (0) target = $region13
    $region12: #{tpu_custom_call.1} parent=1 // pred_region
      %s37 = ssub.s32 256, 256
      %38 = vsyncadd [#allocation4], %s37
      %s40 = sshll.u32 [#allocation5], 4
      %s41 = int_to_ptr.vmem [resolvable:$true] %s40
      %43 = dma.vmem_to_hbm [thread:$0]  %s41, 256, %s1, [#allocation4]
    $region13: #{tpu_custom_call.1} parent=1 // pred_fallthru
      _
    // Predicated region
    $region14: #{tpu_custom_call.1} parent=1 // pred_check
      _
    $region15: #{tpu_custom_call.1} parent=1 // pred_check_branch
      %45 = sbr.rel (0) target = $region17
    $region16: #{tpu_custom_call.1} parent=1 // pred_region
      %46 = dma.done [#allocation4], 256
    $region17: #{tpu_custom_call.1} parent=1 // pred_fallthru
      _
    %47 = vsyncpa [#allocation3], 1
    %48 = vsyncpa [#allocation4], 1

</llo_original>
